<compile_context>
chip_gen: v7x
topology: tpu7x:2x2x1
jax: 0.10.0
libtpu: 0.0.40
codegen_flags: <defaults>
</compile_context>

<pallas_src>
import functools

import jax
import jax.numpy as jnp
from jax.experimental import pallas as pl
from jax.experimental.pallas import tpu as pltpu


def _round_up(n, m):
    return ((n + m - 1) // m) * m


def mlp_kernel(x_ref, w0_ref, w1_ref, w2_ref, w3_ref, b_ref, out_ref):
    """One TILE_B-row slab through all 4 layers. Weights/biases are VMEM-resident."""
    H = w0_ref.shape[1]

    # Packed biases (f32): rows 0..2 are the hidden-layer biases (first H lanes),
    # row 3 is the (lane-padded) output bias.
    b0 = b_ref[0:1, :H]
    b1 = b_ref[1:2, :H]
    b2 = b_ref[2:3, :H]
    b3 = b_ref[3:4, :]

    # Layer 0: input Linear + ReLU (dropout = identity in eval mode).
    h = jnp.dot(x_ref[...], w0_ref[...], preferred_element_type=jnp.float32)
    h = jnp.maximum(h + b0, 0.0)
    # Layer 1: linear1 + ReLU.
    h = jnp.dot(h.astype(w1_ref.dtype), w1_ref[...],
                preferred_element_type=jnp.float32)
    h = jnp.maximum(h + b1, 0.0)
    # Layer 2: linear2 + ReLU.
    h = jnp.dot(h.astype(w2_ref.dtype), w2_ref[...],
                preferred_element_type=jnp.float32)
    h = jnp.maximum(h + b2, 0.0)
    # Output layer: output_fc (no activation — forward() returns raw logits).
    y = jnp.dot(h.astype(w3_ref.dtype), w3_ref[...],
                preferred_element_type=jnp.float32)
    out_ref[...] = (y + b3).astype(out_ref.dtype)


def mlp_forward(x, params, *, tile_b=256, compute_dtype=jnp.bfloat16):
    """x: (B, input_dim) float32. params: dict of (W, b) per layer, W is (in, out)."""
    (w0, b0), (w1, b1), (w2, b2), (w3, b3) = (
        params["input"], params["linear1"], params["linear2"], params["output_fc"]
    )
    B, Din = x.shape
    H = w0.shape[1]
    C = w3.shape[1]
    N_PAD = _round_up(max(C, 128), 128)  # lane-dense output width

    # Pad the output layer to N_PAD columns (zero weights/bias beyond C) so the
    # kernel's output store is a full-width, unmasked vst. Sliced back below.
    w3p = jnp.zeros((H, N_PAD), w3.dtype).at[:, :C].set(w3)

    # Pack all four biases into one (4, N_PAD) f32 array -> one DMA instead of four.
    b_pack = jnp.zeros((4, N_PAD), jnp.float32)
    b_pack = b_pack.at[0, :H].set(b0.reshape(-1))
    b_pack = b_pack.at[1, :H].set(b1.reshape(-1))
    b_pack = b_pack.at[2, :H].set(b2.reshape(-1))
    b_pack = b_pack.at[3, :C].set(b3.reshape(-1))

    # bf16 operands (f32 accumulate inside the kernel): halves MXU passes and DMA bytes.
    xc = x.astype(compute_dtype)
    w0c = w0.astype(compute_dtype)
    w1c = w1.astype(compute_dtype)
    w2c = w2.astype(compute_dtype)
    w3c = w3p.astype(compute_dtype)

    # Batch tiling: full-block for small B, TILE_B-row tiles otherwise.
    if B <= tile_b:
        TILE_B = _round_up(B, 8)
        B_pad = TILE_B
    else:
        TILE_B = tile_b
        B_pad = _round_up(B, TILE_B)
    if B_pad != B:
        xc = jnp.pad(xc, ((0, B_pad - B), (0, 0)))
    nb = B_pad // TILE_B

    out = pl.pallas_call(
        mlp_kernel,
        out_shape=jax.ShapeDtypeStruct((B_pad, N_PAD), jnp.float32),
        grid=(nb,),
        in_specs=[
            pl.BlockSpec((TILE_B, Din), lambda i: (i, 0)),   # x: tiled over rows
            pl.BlockSpec((Din, H), lambda i: (0, 0)),        # w0: resident
            pl.BlockSpec((H, H), lambda i: (0, 0)),          # w1: resident
            pl.BlockSpec((H, H), lambda i: (0, 0)),          # w2: resident
            pl.BlockSpec((H, N_PAD), lambda i: (0, 0)),      # w3 (lane-padded): resident
            pl.BlockSpec((4, N_PAD), lambda i: (0, 0)),      # packed biases: resident
        ],
        out_specs=pl.BlockSpec((TILE_B, N_PAD), lambda i: (i, 0)),
        compiler_params=pltpu.CompilerParams(
            dimension_semantics=("parallel",)),
    )(xc, w0c, w1c, w2c, w3c, b_pack)

    return out[:B, :C]


def init_params(key, input_dim, C, hidden_dim=32):
    """Deterministic PyTorch-like init: U(-1/sqrt(fan_in), 1/sqrt(fan_in))."""
    dims = [(input_dim, hidden_dim), (hidden_dim, hidden_dim),
            (hidden_dim, hidden_dim), (hidden_dim, C)]
    names = ["input", "linear1", "linear2", "output_fc"]
    params = {}
    for name, (fan_in, fan_out) in zip(names, dims):
        key, kw, kb = jax.random.split(key, 3)
        bound = 1.0 / jnp.sqrt(jnp.float32(fan_in))
        w = jax.random.uniform(kw, (fan_in, fan_out), jnp.float32, -bound, bound)
        b = jax.random.uniform(kb, (1, fan_out), jnp.float32, -bound, bound)
        params[name] = (w, b)
    return params


def mlp_reference(x, params, compute_dtype=jnp.bfloat16):
    """Pure-JAX reference using the same bf16-operand / f32-accumulate math."""
    (w0, b0), (w1, b1), (w2, b2), (w3, b3) = (
        params["input"], params["linear1"], params["linear2"], params["output_fc"]
    )

    def lin(h, w, b):
        return jnp.dot(h.astype(compute_dtype), w.astype(compute_dtype),
                       preferred_element_type=jnp.float32) + b

    h = jnp.maximum(lin(x, w0, b0), 0.0)
    h = jnp.maximum(lin(h, w1, b1), 0.0)
    h = jnp.maximum(lin(h, w2, b2), 0.0)
    return lin(h, w3, b3)


def mlp_reference_f32(x, params):
    (w0, b0), (w1, b1), (w2, b2), (w3, b3) = (
        params["input"], params["linear1"], params["linear2"], params["output_fc"]
    )
    h = jnp.maximum(x @ w0 + b0, 0.0)
    h = jnp.maximum(h @ w1 + b1, 0.0)
    h = jnp.maximum(h @ w2 + b2, 0.0)
    return h @ w3 + b3


if __name__ == "__main__":
    key = jax.random.PRNGKey(0)
    input_dim, hidden_dim, C = 16, 32, 10

    key, kp = jax.random.split(key)
    params = init_params(kp, input_dim, C, hidden_dim)

    fwd = jax.jit(functools.partial(mlp_forward, tile_b=256))

    # Small batch (single grid step) and a larger batch (exercises the batch grid
    # with multiple TILE_B tiles + row padding).
    for batch in (8, 600):
        key, kx = jax.random.split(key)
        x = jax.random.normal(kx, (batch, input_dim), jnp.float32)

        out = jax.block_until_ready(fwd(x, params))
        assert out.shape == (batch, C), out.shape

        ref = mlp_reference(x, params)          # same bf16/f32-acc math as the kernel
        err = jnp.max(jnp.abs(out - ref))
        assert jnp.allclose(out, ref, atol=1e-4, rtol=1e-4), f"max abs err {err}"

        ref32 = mlp_reference_f32(x, params)    # sanity vs. pure f32 math
        assert jnp.allclose(out, ref32, atol=5e-2, rtol=5e-2), \
            f"f32 max abs err {jnp.max(jnp.abs(out - ref32))}"

    print("KERNEL_OK")
</pallas_src>

<mosaic_0001>
module attributes {stable_mosaic.version = 11 : i64} {
  func.func @mlp_kernel(%arg0: i32, %arg1: memref<8x16xbf16, #tpu.memory_space<vmem>>, %arg2: memref<16x32xbf16, #tpu.memory_space<vmem>>, %arg3: memref<32x32xbf16, #tpu.memory_space<vmem>>, %arg4: memref<32x32xbf16, #tpu.memory_space<vmem>>, %arg5: memref<32x128xbf16, #tpu.memory_space<vmem>>, %arg6: memref<4x128xf32, #tpu.memory_space<vmem>>, %arg7: memref<8x128xf32, #tpu.memory_space<vmem>>) attributes {dimension_semantics = [#tpu.dimension_semantics<parallel>], iteration_bounds = array<i64: 1>, scalar_prefetch = 0 : i64, scratch_operands = 0 : i64, tpu.core_type = #tpu.core_type<tc>, window_params = [{transform_indices = @transform_0, window_bounds = array<i64: 8, 16>}, {pipeline_mode = #tpu.pipeline_mode<synchronous>, transform_indices = @transform_1, window_bounds = array<i64: 16, 32>}, {pipeline_mode = #tpu.pipeline_mode<synchronous>, transform_indices = @transform_2, window_bounds = array<i64: 32, 32>}, {pipeline_mode = #tpu.pipeline_mode<synchronous>, transform_indices = @transform_3, window_bounds = array<i64: 32, 32>}, {pipeline_mode = #tpu.pipeline_mode<synchronous>, transform_indices = @transform_4, window_bounds = array<i64: 32, 128>}, {pipeline_mode = #tpu.pipeline_mode<synchronous>, transform_indices = @transform_5, window_bounds = array<i64: 4, 128>}, {transform_indices = @transform_6, window_bounds = array<i64: 8, 128>}]} {
    %c0 = arith.constant 0 : index
    %c0_0 = arith.constant 0 : index
    %0 = vector.load %arg6[%c0, %c0_0] : memref<4x128xf32, #tpu.memory_space<vmem>>, vector<1x32xf32>
    %c1 = arith.constant 1 : index
    %c0_1 = arith.constant 0 : index
    %1 = vector.load %arg6[%c1, %c0_1] : memref<4x128xf32, #tpu.memory_space<vmem>>, vector<1x32xf32>
    %c2 = arith.constant 2 : index
    %c0_2 = arith.constant 0 : index
    %2 = vector.load %arg6[%c2, %c0_2] : memref<4x128xf32, #tpu.memory_space<vmem>>, vector<1x32xf32>
    %c3 = arith.constant 3 : index
    %c0_3 = arith.constant 0 : index
    %3 = vector.load %arg6[%c3, %c0_3] : memref<4x128xf32, #tpu.memory_space<vmem>>, vector<1x128xf32>
    %c0_4 = arith.constant 0 : index
    %c0_5 = arith.constant 0 : index
    %4 = vector.load %arg1[%c0_4, %c0_5] : memref<8x16xbf16, #tpu.memory_space<vmem>>, vector<8x16xbf16>
    %c0_6 = arith.constant 0 : index
    %c0_7 = arith.constant 0 : index
    %5 = vector.load %arg2[%c0_6, %c0_7] : memref<16x32xbf16, #tpu.memory_space<vmem>>, vector<16x32xbf16>
    %cst = arith.constant dense<0.000000e+00> : vector<8x32xf32>
    %6 = tpu.matmul %4, %5, %cst {dimension_numbers = #tpu.dot_dimension_numbers<[1], [0], [0], [1], [0, 0, 1, 1], [], []>} : vector<8x16xbf16>, vector<16x32xbf16>, vector<8x32xf32> -> vector<8x32xf32>
    %7 = vector.broadcast %0 : vector<1x32xf32> to vector<8x32xf32>
    %8 = arith.addf %6, %7 : vector<8x32xf32>
    %cst_8 = arith.constant 0.000000e+00 : f32
    %9 = vector.broadcast %cst_8 : f32 to vector<8x32xf32>
    %10 = arith.maximumf %8, %9 : vector<8x32xf32>
    %11 = arith.truncf %10 : vector<8x32xf32> to vector<8x32xbf16>
    %c0_9 = arith.constant 0 : index
    %c0_10 = arith.constant 0 : index
    %12 = vector.load %arg3[%c0_9, %c0_10] : memref<32x32xbf16, #tpu.memory_space<vmem>>, vector<32x32xbf16>
    %cst_11 = arith.constant dense<0.000000e+00> : vector<8x32xf32>
    %13 = tpu.matmul %11, %12, %cst_11 {dimension_numbers = #tpu.dot_dimension_numbers<[1], [0], [0], [1], [0, 0, 1, 1], [], []>} : vector<8x32xbf16>, vector<32x32xbf16>, vector<8x32xf32> -> vector<8x32xf32>
    %14 = vector.broadcast %1 : vector<1x32xf32> to vector<8x32xf32>
    %15 = arith.addf %13, %14 : vector<8x32xf32>
    %cst_12 = arith.constant 0.000000e+00 : f32
    %16 = vector.broadcast %cst_12 : f32 to vector<8x32xf32>
    %17 = arith.maximumf %15, %16 : vector<8x32xf32>
    %18 = arith.truncf %17 : vector<8x32xf32> to vector<8x32xbf16>
    %c0_13 = arith.constant 0 : index
    %c0_14 = arith.constant 0 : index
    %19 = vector.load %arg4[%c0_13, %c0_14] : memref<32x32xbf16, #tpu.memory_space<vmem>>, vector<32x32xbf16>
    %cst_15 = arith.constant dense<0.000000e+00> : vector<8x32xf32>
    %20 = tpu.matmul %18, %19, %cst_15 {dimension_numbers = #tpu.dot_dimension_numbers<[1], [0], [0], [1], [0, 0, 1, 1], [], []>} : vector<8x32xbf16>, vector<32x32xbf16>, vector<8x32xf32> -> vector<8x32xf32>
    %21 = vector.broadcast %2 : vector<1x32xf32> to vector<8x32xf32>
    %22 = arith.addf %20, %21 : vector<8x32xf32>
    %cst_16 = arith.constant 0.000000e+00 : f32
    %23 = vector.broadcast %cst_16 : f32 to vector<8x32xf32>
    %24 = arith.maximumf %22, %23 : vector<8x32xf32>
    %25 = arith.truncf %24 : vector<8x32xf32> to vector<8x32xbf16>
    %c0_17 = arith.constant 0 : index
    %c0_18 = arith.constant 0 : index
    %26 = vector.load %arg5[%c0_17, %c0_18] : memref<32x128xbf16, #tpu.memory_space<vmem>>, vector<32x128xbf16>
    %cst_19 = arith.constant dense<0.000000e+00> : vector<8x128xf32>
    %27 = tpu.matmul %25, %26, %cst_19 {dimension_numbers = #tpu.dot_dimension_numbers<[1], [0], [0], [1], [0, 0, 1, 1], [], []>} : vector<8x32xbf16>, vector<32x128xbf16>, vector<8x128xf32> -> vector<8x128xf32>
    %28 = vector.broadcast %3 : vector<1x128xf32> to vector<8x128xf32>
    %29 = arith.addf %27, %28 : vector<8x128xf32>
    %c0_20 = arith.constant 0 : index
    %c0_21 = arith.constant 0 : index
    %30 = vector.load %arg7[%c0_20, %c0_21] : memref<8x128xf32, #tpu.memory_space<vmem>>, vector<8x128xf32>
    tpu.vector_store %arg7[%c0_20, %c0_21], %29 {strides = array<i32>} : memref<8x128xf32, #tpu.memory_space<vmem>>, vector<8x128xf32>,
    return
  }
  func.func @transform_0(%arg0: i32) -> (i32, i32) {
    %c0_i32 = arith.constant 0 : i32
    %c0_i32_0 = arith.constant 0 : i32
    return %arg0, %c0_i32 : i32, i32
  }
  func.func @transform_1(%arg0: i32) -> (i32, i32) {
    %c0_i32 = arith.constant 0 : i32
    %c0_i32_0 = arith.constant 0 : i32
    %c0_i32_1 = arith.constant 0 : i32
    return %c0_i32, %c0_i32_0 : i32, i32
  }
  func.func @transform_2(%arg0: i32) -> (i32, i32) {
    %c0_i32 = arith.constant 0 : i32
    %c0_i32_0 = arith.constant 0 : i32
    %c0_i32_1 = arith.constant 0 : i32
    return %c0_i32, %c0_i32_0 : i32, i32
  }
  func.func @transform_3(%arg0: i32) -> (i32, i32) {
    %c0_i32 = arith.constant 0 : i32
    %c0_i32_0 = arith.constant 0 : i32
    %c0_i32_1 = arith.constant 0 : i32
    return %c0_i32, %c0_i32_0 : i32, i32
  }
  func.func @transform_4(%arg0: i32) -> (i32, i32) {
    %c0_i32 = arith.constant 0 : i32
    %c0_i32_0 = arith.constant 0 : i32
    %c0_i32_1 = arith.constant 0 : i32
    return %c0_i32, %c0_i32_0 : i32, i32
  }
  func.func @transform_5(%arg0: i32) -> (i32, i32) {
    %c0_i32 = arith.constant 0 : i32
    %c0_i32_0 = arith.constant 0 : i32
    %c0_i32_1 = arith.constant 0 : i32
    return %c0_i32, %c0_i32_0 : i32, i32
  }
  func.func @transform_6(%arg0: i32) -> (i32, i32) {
    %c0_i32 = arith.constant 0 : i32
    %c0_i32_0 = arith.constant 0 : i32
    return %arg0, %c0_i32 : i32, i32
  }
}

</mosaic_0001>

<llo_original>
// kernel: mlp_forward.1
$region0: #{mlp_forward.1}
  #allocation0 [shape = 'u32[]', space=smem, size = 0x4, offset = 0x4, fixed_abs, tag = 'smem constant byte address 0x4 - core index']
  #allocation1 [shape = 'u32[144,128]{1,0:T(1,128)}', space=vmem, size = 0x12000, scoped, tag = 'internal scratch']
  %s0 = inlined_call_operand.vmem [shape: bf16[8,16], index: 0, kind: input, shape index: {}]
  %s1 = inlined_call_operand.vmem [shape: bf16[16,32], index: 1, kind: input, shape index: {}]
  %s2 = inlined_call_operand.vmem [shape: bf16[32,32], index: 2, kind: input, shape index: {}]
  %s3 = inlined_call_operand.vmem [shape: bf16[32,32], index: 3, kind: input, shape index: {}]
  %s4 = inlined_call_operand.vmem [shape: bf16[32,128], index: 4, kind: input, shape index: {}]
  %s5 = inlined_call_operand.vmem [shape: f32[4,128], index: 5, kind: input, shape index: {}]
  %s6 = inlined_call_operand.hbm [shape: f32[8,128], index: 6, kind: output, shape index: {}]
  %s7 = sld [smem:[#allocation0]]
  $region34: #{mlp_forward.1} parent=0
    _
  %s9 = ssub.s32 1, %s7
  %s10 = scalar_select 0, %s9, %s7
  $region1: #{mlp_forward.1} parent=0
    #allocation2 [shape = 'u8[4096]{0}', space=vmem, size = 0x1000, scoped, tag = 'output window, operand 0, single buffered']
    #allocation3 [shape = 's32[1]{0}', space=sflag, size = 0x4, scoped, tag = 'scoped memory for mlp_forward.1']
    %11 = vsyncpa [#allocation3], 0
    // Predicated region
    $region2: #{mlp_forward.1} parent=1 // pred_check
      _
    $region3: #{mlp_forward.1} parent=1 // pred_check_branch
      %13 = sbr.rel (0) target = $region5
    $region4: #{mlp_forward.1} parent=1 // pred_region
      _
    $region5: #{mlp_forward.1} parent=1 // pred_fallthru
      _
    // Predicated region
    $region6: #{mlp_forward.1} parent=1 // pred_check
      _
    $region7: #{mlp_forward.1} parent=1 // pred_check_branch
      %15 = sbr.rel (0) target = $region9
    $region8: #{mlp_forward.1} parent=1 // pred_region
      _
    $region9: #{mlp_forward.1} parent=1 // pred_fallthru
      _
    // Predicated region
    $region10: #{mlp_forward.1} parent=1 // pred_check
      _
    $region11: #{mlp_forward.1} parent=1 // pred_check_branch
      %17 = sbr.rel (0) target = $region13
    $region12: #{mlp_forward.1} parent=1 // pred_region
      _
    $region13: #{mlp_forward.1} parent=1 // pred_fallthru
      _
    // Predicated region
    $region14: #{mlp_forward.1} parent=1 // pred_check
      _
    $region15: #{mlp_forward.1} parent=1 // pred_check_branch
      %19 = sbr.rel (0) target = $region17
    $region16: #{mlp_forward.1} parent=1 // pred_region
      _
    $region17: #{mlp_forward.1} parent=1 // pred_fallthru
      _
    // Predicated region
    $region18: #{mlp_forward.1} parent=1 // pred_check
      _
    $region19: #{mlp_forward.1} parent=1 // pred_check_branch
      %21 = sbr.rel (0) target = $region21
    $region20: #{mlp_forward.1} parent=1 // pred_region
      _
    $region21: #{mlp_forward.1} parent=1 // pred_fallthru
      _
    // Predicated region
    $region22: #{mlp_forward.1} parent=1 // pred_check
      _
    $region23: #{mlp_forward.1} parent=1 // pred_check_branch
      %23 = sbr.rel (0) target = $region25
    $region24: #{mlp_forward.1} parent=1 // pred_region
      _
    $region25: #{mlp_forward.1} parent=1 // pred_fallthru
      _
    %v25 = vld [vmem:[%s5] sm:$0x1]
    %v26 = vld [vmem:[%s5 + $0x1] sm:$0x1]
    %v27 = vld [vmem:[%s5 + $0x2] sm:$0x1]
    %v28 = vld [vmem:[%s5 + $0x3] sm:$0x1]
    %v29 = vld [vmem:[%s0] sm:$0xf]
    %v30 = vld [vmem:[%s1] sm:$0xf]
    %v31 = vld [vmem:[%s1 + $0x4] sm:$0xf]
    %v32 = vlaneseq
    %v33 = vshrl.u32 %v32, 7
    %v34 = vsub.s32 0, %v33
    %v35 = vrot.slane %v25, %v34
    %v38 = vunpack.c.l.b16 %v30
    %v39 = vunpack.c.l.b16 %v31
    %v40 = vpack.c.b16 %v39, %v38
    %vm42 = vcmask 130048
    %v44 = vsel %vm42, %v29, 0
    %46 = vmatprep.subr.bf16.mxu0 0
    %47 = vmatpush1.bf16.msra.mxu0 %v40
    %48 = vmatprep.subr.bf16.mxu0 0
    %49 = vmatpush1.bf16.msra.mxu0 0
    %50 = vmatprep.subr.bf16.mxu0 0
    %51 = vmatpush1.bf16.msra.mxu0 0
    %52 = vmatprep.subr.bf16.mxu0 0
    %53 = vmatpush1.bf16.msra.mxu0 0
    %54 = vmatprep.subr.bf16.mxu0 0
    %55 = vmatpush1.bf16.msra.mxu0 0
    %56 = vmatprep.subr.bf16.mxu0 0
    %57 = vmatpush1.bf16.msra.mxu0 0
    %58 = vmatprep.subr.bf16.mxu0 0
    %59 = vmatpush1.bf16.msra.mxu0 0
    %60 = vmatprep.subr.bf16.mxu0 0
    %61 = vmatpush1.bf16.msra.mxu0 0
    %62 = vmatprep.subr.bf16.mxu0 0
    %63 = vmatpush1.bf16.msra.mxu0 0
    %64 = vmatprep.subr.bf16.mxu0 0
    %65 = vmatpush1.bf16.msra.mxu0 0
    %66 = vmatprep.subr.bf16.mxu0 0
    %67 = vmatpush1.bf16.msra.mxu0 0
    %68 = vmatprep.subr.bf16.mxu0 0
    %69 = vmatpush1.bf16.msra.mxu0 0
    %70 = vmatprep.subr.bf16.mxu0 0
    %71 = vmatpush1.bf16.msra.mxu0 0
    %72 = vmatprep.subr.bf16.mxu0 0
    %73 = vmatpush1.bf16.msra.mxu0 0
    %74 = vmatprep.subr.bf16.mxu0 0
    %75 = vmatpush1.bf16.msra.mxu0 0
    %76 = vmatprep.subr.bf16.mxu0 0
    %77 = vmatpush1.bf16.msra.mxu0 0
    %78 = vmatprep.mubr.bf16.mxu0 0
    %79 = vmatmul.mubr.bf16.gmra.mrb[0].mxu0 %v44
    %v80 = vpop.f32.mrb[0].mxu0
    %v81 = vadd.f32 %v35, %v80
    %v82 = vpop.f32.mrb[0].mxu0
    %v83 = vpop.f32.mrb[0].mxu0
    %v84 = vpop.f32.mrb[0].mxu0
    %85 = vdwg.mxu0
    %v86 = vmax.f32 %v81, 0.0
    %v87 = vpack.c.bf16 %v86, %v86
    %v88 = vld [vmem:[%s2] sm:$0xf]
    %v89 = vld [vmem:[%s2 + $0x4] sm:$0xf]
    %v90 = vld [vmem:[%s2 + $0x8] sm:$0xf]
    %v91 = vld [vmem:[%s2 + $0xc] sm:$0xf]
    %v92 = vlaneseq
    %v93 = vshrl.u32 %v92, 7
    %v94 = vsub.s32 0, %v93
    %v95 = vrot.slane %v26, %v94
    %v100 = vunpack.c.l.b16 %v88
    %v101 = vunpack.c.l.b16 %v89
    %v102 = vunpack.c.l.b16 %v90
    %v103 = vunpack.c.l.b16 %v91
    %v104 = vpack.c.b16 %v101, %v100
    %v105 = vpack.c.b16 %v103, %v102
    %vm108 = vcmask 261120
    %v110 = vsel %vm108, %v87, 0
    %112 = vmatprep.subr.bf16.mxu0 0
    %113 = vmatpush1.bf16.msra.mxu0 %v104
    %114 = vmatprep.subr.bf16.mxu0 0
    %115 = vmatpush1.bf16.msra.mxu0 %v105
    %116 = vmatprep.subr.bf16.mxu0 0
    %117 = vmatpush1.bf16.msra.mxu0 0
    %118 = vmatprep.subr.bf16.mxu0 0
    %119 = vmatpush1.bf16.msra.mxu0 0
    %120 = vmatprep.subr.bf16.mxu0 0
    %121 = vmatpush1.bf16.msra.mxu0 0
    %122 = vmatprep.subr.bf16.mxu0 0
    %123 = vmatpush1.bf16.msra.mxu0 0
    %124 = vmatprep.subr.bf16.mxu0 0
    %125 = vmatpush1.bf16.msra.mxu0 0
    %126 = vmatprep.subr.bf16.mxu0 0
    %127 = vmatpush1.bf16.msra.mxu0 0
    %128 = vmatprep.subr.bf16.mxu0 0
    %129 = vmatpush1.bf16.msra.mxu0 0
    %130 = vmatprep.subr.bf16.mxu0 0
    %131 = vmatpush1.bf16.msra.mxu0 0
    %132 = vmatprep.subr.bf16.mxu0 0
    %133 = vmatpush1.bf16.msra.mxu0 0
    %134 = vmatprep.subr.bf16.mxu0 0
    %135 = vmatpush1.bf16.msra.mxu0 0
    %136 = vmatprep.subr.bf16.mxu0 0
    %137 = vmatpush1.bf16.msra.mxu0 0
    %138 = vmatprep.subr.bf16.mxu0 0
    %139 = vmatpush1.bf16.msra.mxu0 0
    %140 = vmatprep.subr.bf16.mxu0 0
    %141 = vmatpush1.bf16.msra.mxu0 0
    %142 = vmatprep.subr.bf16.mxu0 0
    %143 = vmatpush1.bf16.msra.mxu0 0
    %144 = vmatprep.mubr.bf16.mxu0 0
    %145 = vmatmul.mubr.bf16.gmra.mrb[0].mxu0 %v110
    %v146 = vpop.f32.mrb[0].mxu0
    %v147 = vadd.f32 %v95, %v146
    %v148 = vpop.f32.mrb[0].mxu0
    %v149 = vpop.f32.mrb[0].mxu0
    %v150 = vpop.f32.mrb[0].mxu0
    %151 = vdwg.mxu0
    %v152 = vmax.f32 %v147, 0.0
    %v153 = vpack.c.bf16 %v152, %v152
    %v154 = vld [vmem:[%s3] sm:$0xf]
    %v155 = vld [vmem:[%s3 + $0x4] sm:$0xf]
    %v156 = vld [vmem:[%s3 + $0x8] sm:$0xf]
    %v157 = vld [vmem:[%s3 + $0xc] sm:$0xf]
    %v158 = vlaneseq
    %v159 = vshrl.u32 %v158, 7
    %v160 = vsub.s32 0, %v159
    %v161 = vrot.slane %v27, %v160
    %v166 = vunpack.c.l.b16 %v154
    %v167 = vunpack.c.l.b16 %v155
    %v168 = vunpack.c.l.b16 %v156
    %v169 = vunpack.c.l.b16 %v157
    %v170 = vpack.c.b16 %v167, %v166
    %v171 = vpack.c.b16 %v169, %v168
    %v175 = vsel %vm108, %v153, 0
    %177 = vmatprep.subr.bf16.mxu0 0
    %178 = vmatpush1.bf16.msra.mxu0 %v170
    %179 = vmatprep.subr.bf16.mxu0 0
    %180 = vmatpush1.bf16.msra.mxu0 %v171
    %181 = vmatprep.subr.bf16.mxu0 0
    %182 = vmatpush1.bf16.msra.mxu0 0
    %183 = vmatprep.subr.bf16.mxu0 0
    %184 = vmatpush1.bf16.msra.mxu0 0
    %185 = vmatprep.subr.bf16.mxu0 0
    %186 = vmatpush1.bf16.msra.mxu0 0
    %187 = vmatprep.subr.bf16.mxu0 0
    %188 = vmatpush1.bf16.msra.mxu0 0
    %189 = vmatprep.subr.bf16.mxu0 0
    %190 = vmatpush1.bf16.msra.mxu0 0
    %191 = vmatprep.subr.bf16.mxu0 0
    %192 = vmatpush1.bf16.msra.mxu0 0
    %193 = vmatprep.subr.bf16.mxu0 0
    %194 = vmatpush1.bf16.msra.mxu0 0
    %195 = vmatprep.subr.bf16.mxu0 0
    %196 = vmatpush1.bf16.msra.mxu0 0
    %197 = vmatprep.subr.bf16.mxu0 0
    %198 = vmatpush1.bf16.msra.mxu0 0
    %199 = vmatprep.subr.bf16.mxu0 0
    %200 = vmatpush1.bf16.msra.mxu0 0
    %201 = vmatprep.subr.bf16.mxu0 0
    %202 = vmatpush1.bf16.msra.mxu0 0
    %203 = vmatprep.subr.bf16.mxu0 0
    %204 = vmatpush1.bf16.msra.mxu0 0
    %205 = vmatprep.subr.bf16.mxu0 0
    %206 = vmatpush1.bf16.msra.mxu0 0
    %207 = vmatprep.subr.bf16.mxu0 0
    %208 = vmatpush1.bf16.msra.mxu0 0
    %209 = vmatprep.mubr.bf16.mxu0 0
    %210 = vmatmul.mubr.bf16.gmra.mrb[0].mxu0 %v175
    %v211 = vpop.f32.mrb[0].mxu0
    %v212 = vadd.f32 %v161, %v211
    %v213 = vpop.f32.mrb[0].mxu0
    %v214 = vpop.f32.mrb[0].mxu0
    %v215 = vpop.f32.mrb[0].mxu0
    %216 = vdwg.mxu0
    %v217 = vmax.f32 %v212, 0.0
    %v218 = vpack.c.bf16 %v217, %v217
    %v219 = vld [vmem:[%s4] sm:$0xf]
    %v220 = vld [vmem:[%s4 + $0x4] sm:$0xf]
    %v221 = vld [vmem:[%s4 + $0x8] sm:$0xf]
    %v222 = vld [vmem:[%s4 + $0xc] sm:$0xf]
    %v223 = vlaneseq
    %v224 = vshrl.u32 %v223, 7
    %v225 = vsub.s32 0, %v224
    %v226 = vrot.slane %v28, %v225
    %v231 = vunpack.c.l.b16 %v219
    %v232 = vunpack.c.l.b16 %v220
    %v233 = vunpack.c.l.b16 %v221
    %v234 = vunpack.c.l.b16 %v222
    %v235 = vpack.c.b16 %v232, %v231
    %v236 = vpack.c.b16 %v234, %v233
    %v240 = vsel %vm108, %v218, 0
    %242 = vmatprep.subr.bf16.mxu0 0
    %243 = vmatpush1.bf16.msra.mxu0 %v235
    %244 = vmatprep.subr.bf16.mxu0 0
    %245 = vmatpush1.bf16.msra.mxu0 %v236
    %246 = vmatprep.subr.bf16.mxu0 0
    %247 = vmatpush1.bf16.msra.mxu0 0
    %248 = vmatprep.subr.bf16.mxu0 0
    %249 = vmatpush1.bf16.msra.mxu0 0
    %250 = vmatprep.subr.bf16.mxu0 0
    %251 = vmatpush1.bf16.msra.mxu0 0
    %252 = vmatprep.subr.bf16.mxu0 0
    %253 = vmatpush1.bf16.msra.mxu0 0
    %254 = vmatprep.subr.bf16.mxu0 0
    %255 = vmatpush1.bf16.msra.mxu0 0
    %256 = vmatprep.subr.bf16.mxu0 0
    %257 = vmatpush1.bf16.msra.mxu0 0
    %258 = vmatprep.subr.bf16.mxu0 0
    %259 = vmatpush1.bf16.msra.mxu0 0
    %260 = vmatprep.subr.bf16.mxu0 0
    %261 = vmatpush1.bf16.msra.mxu0 0
    %262 = vmatprep.subr.bf16.mxu0 0
    %263 = vmatpush1.bf16.msra.mxu0 0
    %264 = vmatprep.subr.bf16.mxu0 0
    %265 = vmatpush1.bf16.msra.mxu0 0
    %266 = vmatprep.subr.bf16.mxu0 0
    %267 = vmatpush1.bf16.msra.mxu0 0
    %268 = vmatprep.subr.bf16.mxu0 0
    %269 = vmatpush1.bf16.msra.mxu0 0
    %270 = vmatprep.subr.bf16.mxu0 0
    %271 = vmatpush1.bf16.msra.mxu0 0
    %272 = vmatprep.subr.bf16.mxu0 0
    %273 = vmatpush1.bf16.msra.mxu0 0
    %274 = vmatprep.mubr.bf16.mxu0 0
    %275 = vmatmul.mubr.bf16.gmra.mrb[0].mxu0 %v240
    %v276 = vpop.f32.mrb[0].mxu0
    %v277 = vadd.f32 %v226, %v276
    %v278 = vpop.f32.mrb[0].mxu0
    %v279 = vpop.f32.mrb[0].mxu0
    %v280 = vpop.f32.mrb[0].mxu0
    %281 = vdwg.mxu0
    %282 = vst [vmem:[#allocation2] sm:$0xff] %v277
    // Predicated region
    $region26: #{mlp_forward.1} parent=1 // pred_check
      _
    $region27: #{mlp_forward.1} parent=1 // pred_check_branch
      %284 = sbr.rel (0) target = $region29
    $region28: #{mlp_forward.1} parent=1 // pred_region
      %s286 = ssub.s32 128, 128
      %287 = vsyncadd [#allocation3], %s286
      %s289 = sshll.u32 [#allocation2], 4
      %s290 = int_to_ptr.vmem [resolvable:$true] %s289
      %292 = dma.vmem_to_hbm [thread:$0]  %s290, 128, %s6, [#allocation3]
    $region29: #{mlp_forward.1} parent=1 // pred_fallthru
      _
    // Predicated region
    $region30: #{mlp_forward.1} parent=1 // pred_check
      _
    $region31: #{mlp_forward.1} parent=1 // pred_check_branch
      %294 = sbr.rel (0) target = $region33
    $region32: #{mlp_forward.1} parent=1 // pred_region
      %295 = dma.done [#allocation3], 128
    $region33: #{mlp_forward.1} parent=1 // pred_fallthru
      _
    %296 = vsyncpa [#allocation3], 1

</llo_original>
